<compile_context>
chip_gen: v7x
topology: tpu7x:2x2x1
jax: 0.10.0
libtpu: 0.0.40
codegen_flags: <defaults>
</compile_context>

<pallas_src>
import functools

import jax
import jax.numpy as jnp
from jax.experimental import pallas as pl
from jax.experimental.pallas import tpu as pltpu


# ---------------- synthetic hyperparameters (small, as in the spec) ----------
class hps:
    num_mels = 8
    n_group = 8
    wn_n_layers = 2
    wn_n_channels = 16
    wn_kernel_size = 3


# ---------------- fused WN kernel --------------------------------------------
def _wn_kernel(audio_ref, spect_ref, ws_ref, wc_ref, wi_ref, wr_ref, we_ref,
               b_ref, o_ref, xpad_ref, *, n_channels, n_layers, kernel_size,
               batch, t_len, bias_offsets):
    nc, K, B, T = n_channels, kernel_size, batch, t_len
    W = B * T                                # fused lane width (batch on lanes)
    pad_max = 2 ** (n_layers - 1)            # max dilation == max pad for K=3

    def mm(w_bf16, x_f32):
        # bf16 MXU operands, f32 accumulation.
        return jnp.dot(w_bf16, x_f32.astype(jnp.bfloat16),
                       preferred_element_type=jnp.float32)

    def bias(name):
        lo, hi = bias_offsets[name]
        return b_ref[lo:hi, :]               # (Cout, 1) -> lane broadcast

    # Fold batch onto lanes: tile-aligned concat (T is a multiple of 128).
    x0 = jnp.concatenate([audio_ref[b] for b in range(B)], axis=-1)   # (Cin,  W)
    sp = jnp.concatenate([spect_ref[b] for b in range(B)], axis=-1)   # (Cmel, W)

    # Lane position within each batch element (for per-batch "same" padding).
    lane = jax.lax.broadcasted_iota(jnp.int32, (nc, W), 1)
    if (T & (T - 1)) == 0:
        local = jnp.bitwise_and(lane, T - 1)
    else:
        local = lane % T

    # start 1x1 conv
    h = mm(ws_ref[...], x0) + bias('start')                           # (nc, W)
    # all cond 1x1 convs fused (bias already includes in_b)
    cond = mm(wc_ref[...], sp) + bias('cond')                         # (L*2nc, W)

    # Scratch edges stay zero for the whole kernel; zero once.
    xpad_ref[...] = jnp.zeros_like(xpad_ref)

    output = None
    for i in range(n_layers):
        d = 2 ** i                            # dilation == padding (K=3)

        # im2col taps built from the VMEM scratch; interior (per-batch)
        # boundaries are re-zeroed with the lane mask.
        xpad_ref[:, pad_max:pad_max + W] = h
        taps = []
        for k in range(K):
            s = (k - K // 2) * d              # relative time shift of tap k
            if s == 0:
                taps.append(h)
                continue
            tap = xpad_ref[:, pad_max + s:pad_max + s + W]
            if s < 0:                         # looks at h[t - |s|]
                tap = jnp.where(local >= -s, tap, 0.0)
            else:                             # looks at h[t + s]
                tap = jnp.where(local < T - s, tap, 0.0)
            taps.append(tap)
        xs = jnp.concatenate(taps, axis=0)                            # (K*nc, W)

        z = mm(wi_ref[i], xs) + cond[2 * nc * i:2 * nc * (i + 1), :]  # (2nc, W)
        acts = jnp.tanh(z[:nc, :]) * jax.nn.sigmoid(z[nc:, :])        # (nc, W)

        rsc = 2 * nc if i < n_layers - 1 else nc
        rs = mm(wr_ref[i][:rsc, :], acts) + bias(f'rs{i}')            # (rsc, W)

        if i < n_layers - 1:
            h = h + rs[:nc, :]
            skip = rs[nc:, :]
        else:
            skip = rs
        output = skip if i == 0 else output + skip

    # end 1x1 conv, un-fold batch from lanes (aligned slices).
    out2d = mm(we_ref[...], output) + bias('end')                     # (Cout, W)
    for b in range(B):
        o_ref[b] = out2d[:, b * T:(b + 1) * T]


def wn_forward(params, audio, spect):
    """Fused Pallas WN forward. audio:(B,Cin,T), spect:(B,Cmel,T) -> (B,2*Cin,T)."""
    nc = hps.wn_n_channels
    K = hps.wn_kernel_size
    L = hps.wn_n_layers
    B, Cin, T = audio.shape
    Cmel = spect.shape[1]
    Cout = 2 * Cin

    # ---- weight layout preprocessing (pure plumbing, done once) ----
    w_start = params['start_w'].reshape(nc, Cin).astype(jnp.bfloat16)
    w_cond = jnp.concatenate(
        [params['cond_w'][i].reshape(2 * nc, Cmel) for i in range(L)],
        axis=0).astype(jnp.bfloat16)                                  # (L*2nc, Cmel)
    # im2col weight: W[o, k*nc + c] = in_w[o, c, k]
    w_in = jnp.stack(
        [jnp.transpose(params['in_w'][i], (0, 2, 1)).reshape(2 * nc, K * nc)
         for i in range(L)], axis=0).astype(jnp.bfloat16)             # (L, 2nc, K*nc)
    w_rs_list = []
    for i in range(L):
        w = params['rs_w'][i].reshape(-1, nc)
        if w.shape[0] < 2 * nc:               # pad last layer to 2nc rows
            w = jnp.concatenate(
                [w, jnp.zeros((2 * nc - w.shape[0], nc), w.dtype)], axis=0)
        w_rs_list.append(w)
    w_rs = jnp.stack(w_rs_list, axis=0).astype(jnp.bfloat16)          # (L, 2nc, nc)
    w_end = params['end_w'].reshape(Cout, nc).astype(jnp.bfloat16)

    # ---- pack all biases into one (N,1) f32 operand; fold in_b into cond_b.
    # Each chunk start is padded to a multiple of 8 rows (aligned sublane slices).
    bias_chunks, bias_offsets = [], {}

    def add_bias(name, v):
        lo = sum(int(c.shape[0]) for c in bias_chunks)
        v = v.reshape(-1)
        n = int(v.size)
        bias_offsets[name] = (lo, lo + n)
        pad = (-n) % 8
        if pad:
            v = jnp.concatenate([v, jnp.zeros((pad,), v.dtype)])
        bias_chunks.append(v)

    add_bias('start', params['start_b'])
    add_bias('cond', jnp.concatenate(
        [params['cond_b'][i] + params['in_b'][i] for i in range(L)]))
    for i in range(L):
        add_bias(f'rs{i}', params['rs_b'][i])
    add_bias('end', params['end_b'])
    bias_all = jnp.concatenate(bias_chunks).reshape(-1, 1).astype(jnp.float32)

    kernel = functools.partial(_wn_kernel, n_channels=nc, n_layers=L,
                               kernel_size=K, batch=B, t_len=T,
                               bias_offsets=bias_offsets)
    pad_max = 2 ** (L - 1)

    return pl.pallas_call(
        kernel,
        out_shape=jax.ShapeDtypeStruct((B, Cout, T), jnp.float32),
        in_specs=[pl.BlockSpec(memory_space=pltpu.MemorySpace.VMEM)
                  for _ in range(8)],
        out_specs=pl.BlockSpec(memory_space=pltpu.MemorySpace.VMEM),
        scratch_shapes=[pltpu.VMEM((nc, B * T + 2 * pad_max), jnp.float32)],
    )(audio.astype(jnp.float32), spect.astype(jnp.float32),
      w_start, w_cond, w_in, w_rs, w_end, bias_all)


# ---------------- pure-JAX reference (correctness oracle) --------------------
def _conv1d_ref(x, w, b, dilation=1, padding=0):
    K = w.shape[2]
    xp = jnp.pad(x, ((0, 0), (0, 0), (padding, padding)))
    T_out = xp.shape[2] - dilation * (K - 1)
    out = b[None, :, None]
    for k in range(K):
        out = out + jnp.einsum(
            'oi,bit->bot', w[:, :, k],
            xp[:, :, k * dilation:k * dilation + T_out],
            precision=jax.lax.Precision.HIGHEST)
    return out


def wn_reference(p, audio, spect):
    nc, L, K = hps.wn_n_channels, hps.wn_n_layers, hps.wn_kernel_size
    a = _conv1d_ref(audio, p['start_w'], p['start_b'])
    output = None
    for i in range(L):
        d = 2 ** i
        pad = (K * d - d) // 2
        z = (_conv1d_ref(a, p['in_w'][i], p['in_b'][i], d, pad)
             + _conv1d_ref(spect, p['cond_w'][i], p['cond_b'][i]))
        acts = jnp.tanh(z[:, :nc, :]) * jax.nn.sigmoid(z[:, nc:, :])
        rs = _conv1d_ref(acts, p['rs_w'][i], p['rs_b'][i])
        if i < L - 1:
            a = a + rs[:, :nc, :]
            skip = rs[:, nc:, :]
        else:
            skip = rs
        output = skip if i == 0 else output + skip
    return _conv1d_ref(output, p['end_w'], p['end_b'])


# ---------------- main --------------------------------------------------------
if __name__ == "__main__":
    key = jax.random.PRNGKey(0)
    n_in = hps.n_group // 2                      # 4 (as used by WaveGlow coupling)
    B, T = 2, 128                                # T=128 -> lane-dense slabs
    Cmel = hps.num_mels * hps.n_group            # 64
    nc, K, L = hps.wn_n_channels, hps.wn_kernel_size, hps.wn_n_layers

    keys = iter(jax.random.split(key, 64))
    scale = 0.25
    # weight_norm is just a reparameterization; effective weights drawn directly.
    # NOTE: the PyTorch module zero-inits the end conv (a training-time detail);
    # random weights are used here so the numeric check exercises the full path.
    params = {
        'start_w': scale * jax.random.normal(next(keys), (nc, n_in, 1), jnp.float32),
        'start_b': scale * jax.random.normal(next(keys), (nc,), jnp.float32),
        'in_w': [], 'in_b': [], 'cond_w': [], 'cond_b': [], 'rs_w': [], 'rs_b': [],
        'end_w': scale * jax.random.normal(next(keys), (2 * n_in, nc, 1), jnp.float32),
        'end_b': scale * jax.random.normal(next(keys), (2 * n_in,), jnp.float32),
    }
    for i in range(L):
        rsc = 2 * nc if i < L - 1 else nc
        params['in_w'].append(scale * jax.random.normal(next(keys), (2 * nc, nc, K), jnp.float32))
        params['in_b'].append(scale * jax.random.normal(next(keys), (2 * nc,), jnp.float32))
        params['cond_w'].append(scale * jax.random.normal(next(keys), (2 * nc, Cmel, 1), jnp.float32))
        params['cond_b'].append(scale * jax.random.normal(next(keys), (2 * nc,), jnp.float32))
        params['rs_w'].append(scale * jax.random.normal(next(keys), (rsc, nc, 1), jnp.float32))
        params['rs_b'].append(scale * jax.random.normal(next(keys), (rsc,), jnp.float32))

    ka, ks = jax.random.split(jax.random.PRNGKey(1))
    audio = jax.random.normal(ka, (B, n_in, T), jnp.float32)
    spect = jax.random.normal(ks, (B, Cmel, T), jnp.float32)

    out = wn_forward(params, audio, spect)
    out = jax.block_until_ready(out)
    assert out.shape == (B, 2 * n_in, T)

    # Reference uses bf16-rounded weights so the only delta is the intended
    # bf16-operand / f32-accumulate matmul path inside the kernel.
    params_bf = jax.tree_util.tree_map(
        lambda x: x.astype(jnp.bfloat16).astype(jnp.float32), params)
    ref = wn_reference(params_bf, audio, spect)
    err = float(jnp.max(jnp.abs(out - ref)))
    tol = 5e-2 * float(jnp.max(jnp.abs(ref))) + 5e-3
    assert err < tol, f"max abs error {err} (tol {tol})"

    print("KERNEL_OK")
</pallas_src>

<mosaic_0001>
module attributes {stable_mosaic.version = 11 : i64} {
  func.func @_wn_kernel(%arg0: memref<2x4x128xf32, #tpu.memory_space<vmem>>, %arg1: memref<2x64x128xf32, #tpu.memory_space<vmem>>, %arg2: memref<16x4xbf16, #tpu.memory_space<vmem>>, %arg3: memref<64x64xbf16, #tpu.memory_space<vmem>>, %arg4: memref<2x32x48xbf16, #tpu.memory_space<vmem>>, %arg5: memref<2x32x16xbf16, #tpu.memory_space<vmem>>, %arg6: memref<8x16xbf16, #tpu.memory_space<vmem>>, %arg7: memref<136x1xf32, #tpu.memory_space<vmem>>, %arg8: memref<2x8x128xf32, #tpu.memory_space<vmem>>, %arg9: memref<16x260xf32, #tpu.memory_space<vmem>>) attributes {dimension_semantics = [], scalar_prefetch = 0 : i64, scratch_operands = 1 : i64, tpu.core_type = #tpu.core_type<tc>} {
    %c0 = arith.constant 0 : index
    %c0_0 = arith.constant 0 : index
    %c0_1 = arith.constant 0 : index
    %0 = vector.load %arg0[%c0, %c0_0, %c0_1] : memref<2x4x128xf32, #tpu.memory_space<vmem>>, vector<1x4x128xf32>
    %1 = vector.shape_cast %0 : vector<1x4x128xf32> to vector<4x128xf32>
    %c1 = arith.constant 1 : index
    %c0_2 = arith.constant 0 : index
    %c0_3 = arith.constant 0 : index
    %2 = vector.load %arg0[%c1, %c0_2, %c0_3] : memref<2x4x128xf32, #tpu.memory_space<vmem>>, vector<1x4x128xf32>
    %3 = vector.shape_cast %2 : vector<1x4x128xf32> to vector<4x128xf32>
    %4 = tpu.concatenate %1, %3 in 1 : vector<4x128xf32>, vector<4x128xf32> -> vector<4x256xf32>
    %c0_4 = arith.constant 0 : index
    %c0_5 = arith.constant 0 : index
    %c0_6 = arith.constant 0 : index
    %5 = vector.load %arg1[%c0_4, %c0_5, %c0_6] : memref<2x64x128xf32, #tpu.memory_space<vmem>>, vector<1x64x128xf32>
    %6 = vector.shape_cast %5 : vector<1x64x128xf32> to vector<64x128xf32>
    %c1_7 = arith.constant 1 : index
    %c0_8 = arith.constant 0 : index
    %c0_9 = arith.constant 0 : index
    %7 = vector.load %arg1[%c1_7, %c0_8, %c0_9] : memref<2x64x128xf32, #tpu.memory_space<vmem>>, vector<1x64x128xf32>
    %8 = vector.shape_cast %7 : vector<1x64x128xf32> to vector<64x128xf32>
    %9 = tpu.concatenate %6, %8 in 1 : vector<64x128xf32>, vector<64x128xf32> -> vector<64x256xf32>
    %10 = tpu.iota {dimensions = array<i32: 1>} : vector<16x256xi32>
    %c127_i32 = arith.constant 127 : i32
    %11 = vector.broadcast %c127_i32 : i32 to vector<16x256xi32>
    %12 = arith.andi %10, %11 : vector<16x256xi32>
    %c0_10 = arith.constant 0 : index
    %c0_11 = arith.constant 0 : index
    %13 = vector.load %arg2[%c0_10, %c0_11] : memref<16x4xbf16, #tpu.memory_space<vmem>>, vector<16x4xbf16>
    %14 = arith.truncf %4 : vector<4x256xf32> to vector<4x256xbf16>
    %cst = arith.constant dense<0.000000e+00> : vector<16x256xf32>
    %15 = tpu.matmul %13, %14, %cst {dimension_numbers = #tpu.dot_dimension_numbers<[1], [0], [0], [1], [0, 0, 1, 1], [], []>} : vector<16x4xbf16>, vector<4x256xbf16>, vector<16x256xf32> -> vector<16x256xf32>
    %c0_12 = arith.constant 0 : index
    %c0_13 = arith.constant 0 : index
    %16 = vector.load %arg7[%c0_12, %c0_13] : memref<136x1xf32, #tpu.memory_space<vmem>>, vector<16x1xf32>
    %17 = vector.broadcast %16 : vector<16x1xf32> to vector<16x256xf32>
    %18 = arith.addf %15, %17 : vector<16x256xf32>
    %c0_14 = arith.constant 0 : index
    %c0_15 = arith.constant 0 : index
    %19 = vector.load %arg3[%c0_14, %c0_15] : memref<64x64xbf16, #tpu.memory_space<vmem>>, vector<64x64xbf16>
    %20 = arith.truncf %9 : vector<64x256xf32> to vector<64x256xbf16>
    %cst_16 = arith.constant dense<0.000000e+00> : vector<64x256xf32>
    %21 = tpu.matmul %19, %20, %cst_16 {dimension_numbers = #tpu.dot_dimension_numbers<[1], [0], [0], [1], [0, 0, 1, 1], [], []>} : vector<64x64xbf16>, vector<64x256xbf16>, vector<64x256xf32> -> vector<64x256xf32>
    %c16 = arith.constant 16 : index
    %c0_17 = arith.constant 0 : index
    %22 = vector.load %arg7[%c16, %c0_17] : memref<136x1xf32, #tpu.memory_space<vmem>>, vector<64x1xf32>
    %23 = vector.broadcast %22 : vector<64x1xf32> to vector<64x256xf32>
    %24 = arith.addf %21, %23 : vector<64x256xf32>
    %cst_18 = arith.constant 0.000000e+00 : f32
    %25 = vector.broadcast %cst_18 : f32 to vector<16x260xf32>
    %c0_19 = arith.constant 0 : index
    %c0_20 = arith.constant 0 : index
    %26 = vector.load %arg9[%c0_19, %c0_20] : memref<16x260xf32, #tpu.memory_space<vmem>>, vector<16x260xf32>
    tpu.vector_store %arg9[%c0_19, %c0_20], %25 {strides = array<i32>} : memref<16x260xf32, #tpu.memory_space<vmem>>, vector<16x260xf32>,
    %c0_21 = arith.constant 0 : index
    %c2 = arith.constant 2 : index
    %27 = vector.load %arg9[%c0_21, %c2] : memref<16x260xf32, #tpu.memory_space<vmem>>, vector<16x256xf32>
    tpu.vector_store %arg9[%c0_21, %c2], %18 {strides = array<i32>} : memref<16x260xf32, #tpu.memory_space<vmem>>, vector<16x256xf32>,
    %c0_22 = arith.constant 0 : index
    %c1_23 = arith.constant 1 : index
    %28 = vector.load %arg9[%c0_22, %c1_23] : memref<16x260xf32, #tpu.memory_space<vmem>>, vector<16x256xf32>
    %c1_i32 = arith.constant 1 : i32
    %29 = vector.broadcast %c1_i32 : i32 to vector<16x256xi32>
    %30 = arith.cmpi sge, %12, %29 : vector<16x256xi32>
    %cst_24 = arith.constant 0.000000e+00 : f32
    %31 = vector.broadcast %cst_24 : f32 to vector<16x256xf32>
    %32 = arith.select %30, %28, %31 : vector<16x256xi1>, vector<16x256xf32>
    %c0_25 = arith.constant 0 : index
    %c3 = arith.constant 3 : index
    %33 = vector.load %arg9[%c0_25, %c3] : memref<16x260xf32, #tpu.memory_space<vmem>>, vector<16x256xf32>
    %c127_i32_26 = arith.constant 127 : i32
    %34 = vector.broadcast %c127_i32_26 : i32 to vector<16x256xi32>
    %35 = arith.cmpi slt, %12, %34 : vector<16x256xi32>
    %cst_27 = arith.constant 0.000000e+00 : f32
    %36 = vector.broadcast %cst_27 : f32 to vector<16x256xf32>
    %37 = arith.select %35, %33, %36 : vector<16x256xi1>, vector<16x256xf32>
    %38 = tpu.concatenate %32, %18, %37 in 0 : vector<16x256xf32>, vector<16x256xf32>, vector<16x256xf32> -> vector<48x256xf32>
    %c0_28 = arith.constant 0 : index
    %c0_29 = arith.constant 0 : index
    %c0_30 = arith.constant 0 : index
    %39 = vector.load %arg4[%c0_28, %c0_29, %c0_30] : memref<2x32x48xbf16, #tpu.memory_space<vmem>>, vector<1x32x48xbf16>
    %40 = vector.shape_cast %39 : vector<1x32x48xbf16> to vector<32x48xbf16>
    %41 = arith.truncf %38 : vector<48x256xf32> to vector<48x256xbf16>
    %cst_31 = arith.constant dense<0.000000e+00> : vector<32x256xf32>
    %42 = tpu.matmul %40, %41, %cst_31 {dimension_numbers = #tpu.dot_dimension_numbers<[1], [0], [0], [1], [0, 0, 1, 1], [], []>} : vector<32x48xbf16>, vector<48x256xbf16>, vector<32x256xf32> -> vector<32x256xf32>
    %43 = vector.extract_strided_slice %24 {offsets = [0, 0], sizes = [32, 256], strides = [1, 1]} : vector<64x256xf32> to vector<32x256xf32>
    %44 = arith.addf %42, %43 : vector<32x256xf32>
    %45 = vector.extract_strided_slice %44 {offsets = [0, 0], sizes = [16, 256], strides = [1, 1]} : vector<32x256xf32> to vector<16x256xf32>
    %46 = math.tanh %45 : vector<16x256xf32>
    %47 = vector.extract_strided_slice %44 {offsets = [16, 0], sizes = [16, 256], strides = [1, 1]} : vector<32x256xf32> to vector<16x256xf32>
    %48 = arith.negf %47 : vector<16x256xf32>
    %49 = math.exp %48 : vector<16x256xf32>
    %cst_32 = arith.constant 1.000000e+00 : f32
    %50 = vector.broadcast %cst_32 : f32 to vector<16x256xf32>
    %51 = arith.addf %50, %49 : vector<16x256xf32>
    %52 = arith.divf %50, %51 : vector<16x256xf32>
    %53 = arith.mulf %46, %52 : vector<16x256xf32>
    %c0_33 = arith.constant 0 : index
    %c0_34 = arith.constant 0 : index
    %c0_35 = arith.constant 0 : index
    %54 = vector.load %arg5[%c0_33, %c0_34, %c0_35] : memref<2x32x16xbf16, #tpu.memory_space<vmem>>, vector<1x32x16xbf16>
    %55 = vector.shape_cast %54 : vector<1x32x16xbf16> to vector<32x16xbf16>
    %56 = arith.truncf %53 : vector<16x256xf32> to vector<16x256xbf16>
    %cst_36 = arith.constant dense<0.000000e+00> : vector<32x256xf32>
    %57 = tpu.matmul %55, %56, %cst_36 {dimension_numbers = #tpu.dot_dimension_numbers<[1], [0], [0], [1], [0, 0, 1, 1], [], []>} : vector<32x16xbf16>, vector<16x256xbf16>, vector<32x256xf32> -> vector<32x256xf32>
    %c80 = arith.constant 80 : index
    %c0_37 = arith.constant 0 : index
    %58 = vector.load %arg7[%c80, %c0_37] : memref<136x1xf32, #tpu.memory_space<vmem>>, vector<32x1xf32>
    %59 = vector.broadcast %58 : vector<32x1xf32> to vector<32x256xf32>
    %60 = arith.addf %57, %59 : vector<32x256xf32>
    %61 = vector.extract_strided_slice %60 {offsets = [0, 0], sizes = [16, 256], strides = [1, 1]} : vector<32x256xf32> to vector<16x256xf32>
    %62 = arith.addf %18, %61 : vector<16x256xf32>
    %63 = vector.extract_strided_slice %60 {offsets = [16, 0], sizes = [16, 256], strides = [1, 1]} : vector<32x256xf32> to vector<16x256xf32>
    %c0_38 = arith.constant 0 : index
    %c2_39 = arith.constant 2 : index
    %64 = vector.load %arg9[%c0_38, %c2_39] : memref<16x260xf32, #tpu.memory_space<vmem>>, vector<16x256xf32>
    tpu.vector_store %arg9[%c0_38, %c2_39], %62 {strides = array<i32>} : memref<16x260xf32, #tpu.memory_space<vmem>>, vector<16x256xf32>,
    %c0_40 = arith.constant 0 : index
    %c0_41 = arith.constant 0 : index
    %65 = vector.load %arg9[%c0_40, %c0_41] : memref<16x260xf32, #tpu.memory_space<vmem>>, vector<16x256xf32>
    %c2_i32 = arith.constant 2 : i32
    %66 = vector.broadcast %c2_i32 : i32 to vector<16x256xi32>
    %67 = arith.cmpi sge, %12, %66 : vector<16x256xi32>
    %cst_42 = arith.constant 0.000000e+00 : f32
    %68 = vector.broadcast %cst_42 : f32 to vector<16x256xf32>
    %69 = arith.select %67, %65, %68 : vector<16x256xi1>, vector<16x256xf32>
    %c0_43 = arith.constant 0 : index
    %c4 = arith.constant 4 : index
    %70 = vector.load %arg9[%c0_43, %c4] : memref<16x260xf32, #tpu.memory_space<vmem>>, vector<16x256xf32>
    %c126_i32 = arith.constant 126 : i32
    %71 = vector.broadcast %c126_i32 : i32 to vector<16x256xi32>
    %72 = arith.cmpi slt, %12, %71 : vector<16x256xi32>
    %cst_44 = arith.constant 0.000000e+00 : f32
    %73 = vector.broadcast %cst_44 : f32 to vector<16x256xf32>
    %74 = arith.select %72, %70, %73 : vector<16x256xi1>, vector<16x256xf32>
    %75 = tpu.concatenate %69, %62, %74 in 0 : vector<16x256xf32>, vector<16x256xf32>, vector<16x256xf32> -> vector<48x256xf32>
    %c1_45 = arith.constant 1 : index
    %c0_46 = arith.constant 0 : index
    %c0_47 = arith.constant 0 : index
    %76 = vector.load %arg4[%c1_45, %c0_46, %c0_47] : memref<2x32x48xbf16, #tpu.memory_space<vmem>>, vector<1x32x48xbf16>
    %77 = vector.shape_cast %76 : vector<1x32x48xbf16> to vector<32x48xbf16>
    %78 = arith.truncf %75 : vector<48x256xf32> to vector<48x256xbf16>
    %cst_48 = arith.constant dense<0.000000e+00> : vector<32x256xf32>
    %79 = tpu.matmul %77, %78, %cst_48 {dimension_numbers = #tpu.dot_dimension_numbers<[1], [0], [0], [1], [0, 0, 1, 1], [], []>} : vector<32x48xbf16>, vector<48x256xbf16>, vector<32x256xf32> -> vector<32x256xf32>
    %80 = vector.extract_strided_slice %24 {offsets = [32, 0], sizes = [32, 256], strides = [1, 1]} : vector<64x256xf32> to vector<32x256xf32>
    %81 = arith.addf %79, %80 : vector<32x256xf32>
    %82 = vector.extract_strided_slice %81 {offsets = [0, 0], sizes = [16, 256], strides = [1, 1]} : vector<32x256xf32> to vector<16x256xf32>
    %83 = math.tanh %82 : vector<16x256xf32>
    %84 = vector.extract_strided_slice %81 {offsets = [16, 0], sizes = [16, 256], strides = [1, 1]} : vector<32x256xf32> to vector<16x256xf32>
    %85 = arith.negf %84 : vector<16x256xf32>
    %86 = math.exp %85 : vector<16x256xf32>
    %cst_49 = arith.constant 1.000000e+00 : f32
    %87 = vector.broadcast %cst_49 : f32 to vector<16x256xf32>
    %88 = arith.addf %87, %86 : vector<16x256xf32>
    %89 = arith.divf %87, %88 : vector<16x256xf32>
    %90 = arith.mulf %83, %89 : vector<16x256xf32>
    %c1_50 = arith.constant 1 : index
    %c0_51 = arith.constant 0 : index
    %c0_52 = arith.constant 0 : index
    %91 = vector.load %arg5[%c1_50, %c0_51, %c0_52] : memref<2x32x16xbf16, #tpu.memory_space<vmem>>, vector<1x32x16xbf16>
    %92 = vector.shape_cast %91 : vector<1x32x16xbf16> to vector<32x16xbf16>
    %93 = vector.extract_strided_slice %92 {offsets = [0, 0], sizes = [16, 16], strides = [1, 1]} : vector<32x16xbf16> to vector<16x16xbf16>
    %94 = arith.truncf %90 : vector<16x256xf32> to vector<16x256xbf16>
    %cst_53 = arith.constant dense<0.000000e+00> : vector<16x256xf32>
    %95 = tpu.matmul %93, %94, %cst_53 {dimension_numbers = #tpu.dot_dimension_numbers<[1], [0], [0], [1], [0, 0, 1, 1], [], []>} : vector<16x16xbf16>, vector<16x256xbf16>, vector<16x256xf32> -> vector<16x256xf32>
    %c112 = arith.constant 112 : index
    %c0_54 = arith.constant 0 : index
    %96 = vector.load %arg7[%c112, %c0_54] : memref<136x1xf32, #tpu.memory_space<vmem>>, vector<16x1xf32>
    %97 = vector.broadcast %96 : vector<16x1xf32> to vector<16x256xf32>
    %98 = arith.addf %95, %97 : vector<16x256xf32>
    %99 = arith.addf %63, %98 : vector<16x256xf32>
    %c0_55 = arith.constant 0 : index
    %c0_56 = arith.constant 0 : index
    %100 = vector.load %arg6[%c0_55, %c0_56] : memref<8x16xbf16, #tpu.memory_space<vmem>>, vector<8x16xbf16>
    %101 = arith.truncf %99 : vector<16x256xf32> to vector<16x256xbf16>
    %cst_57 = arith.constant dense<0.000000e+00> : vector<8x256xf32>
    %102 = tpu.matmul %100, %101, %cst_57 {dimension_numbers = #tpu.dot_dimension_numbers<[1], [0], [0], [1], [0, 0, 1, 1], [], []>} : vector<8x16xbf16>, vector<16x256xbf16>, vector<8x256xf32> -> vector<8x256xf32>
    %c128 = arith.constant 128 : index
    %c0_58 = arith.constant 0 : index
    %103 = vector.load %arg7[%c128, %c0_58] : memref<136x1xf32, #tpu.memory_space<vmem>>, vector<8x1xf32>
    %104 = vector.broadcast %103 : vector<8x1xf32> to vector<8x256xf32>
    %105 = arith.addf %102, %104 : vector<8x256xf32>
    %106 = vector.extract_strided_slice %105 {offsets = [0, 0], sizes = [8, 128], strides = [1, 1]} : vector<8x256xf32> to vector<8x128xf32>
    %c0_59 = arith.constant 0 : index
    %c0_60 = arith.constant 0 : index
    %c0_61 = arith.constant 0 : index
    %107 = vector.load %arg8[%c0_59, %c0_60, %c0_61] : memref<2x8x128xf32, #tpu.memory_space<vmem>>, vector<1x8x128xf32>
    %108 = vector.shape_cast %107 : vector<1x8x128xf32> to vector<8x128xf32>
    %109 = vector.shape_cast %106 : vector<8x128xf32> to vector<1x8x128xf32>
    tpu.vector_store %arg8[%c0_59, %c0_60, %c0_61], %109 {strides = array<i32>} : memref<2x8x128xf32, #tpu.memory_space<vmem>>, vector<1x8x128xf32>,
    %110 = vector.extract_strided_slice %105 {offsets = [0, 128], sizes = [8, 128], strides = [1, 1]} : vector<8x256xf32> to vector<8x128xf32>
    %c1_62 = arith.constant 1 : index
    %c0_63 = arith.constant 0 : index
    %c0_64 = arith.constant 0 : index
    %111 = vector.load %arg8[%c1_62, %c0_63, %c0_64] : memref<2x8x128xf32, #tpu.memory_space<vmem>>, vector<1x8x128xf32>
    %112 = vector.shape_cast %111 : vector<1x8x128xf32> to vector<8x128xf32>
    %113 = vector.shape_cast %110 : vector<8x128xf32> to vector<1x8x128xf32>
    tpu.vector_store %arg8[%c1_62, %c0_63, %c0_64], %113 {strides = array<i32>} : memref<2x8x128xf32, #tpu.memory_space<vmem>>, vector<1x8x128xf32>,
    return
  }
}

</mosaic_0001>

<llo_original>
// kernel: tpu_custom_call.1
$region0: #{tpu_custom_call.1}
  #allocation0 [shape = 'u32[]', space=smem, size = 0x4, offset = 0x4, fixed_abs, tag = 'smem constant byte address 0x4 - core index']
  #allocation1 [shape = 'u32[144,128]{1,0:T(1,128)}', space=vmem, size = 0x12000, scoped, tag = 'internal scratch']
  #allocation2 [shape = 'f32[16,260]{1,0:T(8,128)}', space=vmem, size = 0x6000, scoped, tag = 'scratch operand']
  %s0 = inlined_call_operand.hbm [shape: f32[2,4,128], index: 0, kind: input, shape index: {}]
  %s1 = inlined_call_operand.vmem [shape: f32[2,64,128], index: 1, kind: input, shape index: {}]
  %s2 = inlined_call_operand.vmem [shape: bf16[16,4], index: 2, kind: input, shape index: {}]
  %s3 = inlined_call_operand.vmem [shape: bf16[64,64], index: 3, kind: input, shape index: {}]
  %s4 = inlined_call_operand.vmem [shape: bf16[2,32,48], index: 4, kind: input, shape index: {}]
  %s5 = inlined_call_operand.vmem [shape: bf16[2,32,16], index: 5, kind: input, shape index: {}]
  %s6 = inlined_call_operand.vmem [shape: bf16[8,16], index: 6, kind: input, shape index: {}]
  %s7 = inlined_call_operand.vmem [shape: f32[136,1], index: 7, kind: input, shape index: {}]
  %s8 = inlined_call_operand.hbm [shape: f32[2,8,128], index: 8, kind: output, shape index: {}]
  %s9 = sld [smem:[#allocation0]]
  $region46: #{tpu_custom_call.1} parent=0
    _
  %s11 = ssub.s32 1, %s9
  %s12 = scalar_select 0, %s11, %s9
  $region1: #{tpu_custom_call.1} parent=0
    #allocation3 [shape = 'u8[4096]{0}', space=vmem, size = 0x1000, scoped, tag = 'input window, operand 0, single buffered']
    #allocation4 [shape = 's32[1]{0}', space=sflag, size = 0x4, scoped, tag = 'scoped memory for tpu_custom_call.1']
    #allocation5 [shape = 's32[1]{0}', space=sflag, size = 0x4, scoped, tag = 'scoped memory for tpu_custom_call.1']
    #allocation6 [shape = 'u8[8192]{0}', space=vmem, size = 0x2000, scoped, tag = 'output window, operand 0, single buffered']
    %13 = vsyncpa [#allocation4], 0
    %14 = vsyncpa [#allocation5], 0
    // Predicated region
    $region2: #{tpu_custom_call.1} parent=1 // pred_check
      _
    $region3: #{tpu_custom_call.1} parent=1 // pred_check_branch
      %16 = sbr.rel (0) target = $region5
    $region4: #{tpu_custom_call.1} parent=1 // pred_region
      %s18 = ssub.s32 128, 128
      %19 = vsyncadd [#allocation4], %s18
      %s20 = sshll.u32 [#allocation3], 4
      %s21 = int_to_ptr.vmem [resolvable:$true] %s20
      %26 = dma.hbm_to_vmem [thread:$0]  %s0, 128, %s21, [#allocation4], 64, 64, 4
    $region5: #{tpu_custom_call.1} parent=1 // pred_fallthru
      _
    // Predicated region
    $region6: #{tpu_custom_call.1} parent=1 // pred_check
      _
    $region7: #{tpu_custom_call.1} parent=1 // pred_check_branch
      %28 = sbr.rel (0) target = $region9
    $region8: #{tpu_custom_call.1} parent=1 // pred_region
      _
    $region9: #{tpu_custom_call.1} parent=1 // pred_fallthru
      _
    // Predicated region
    $region10: #{tpu_custom_call.1} parent=1 // pred_check
      _
    $region11: #{tpu_custom_call.1} parent=1 // pred_check_branch
      %30 = sbr.rel (0) target = $region13
    $region12: #{tpu_custom_call.1} parent=1 // pred_region
      _
    $region13: #{tpu_custom_call.1} parent=1 // pred_fallthru
      _
    // Predicated region
    $region14: #{tpu_custom_call.1} parent=1 // pred_check
      _
    $region15: #{tpu_custom_call.1} parent=1 // pred_check_branch
      %32 = sbr.rel (0) target = $region17
    $region16: #{tpu_custom_call.1} parent=1 // pred_region
      _
    $region17: #{tpu_custom_call.1} parent=1 // pred_fallthru
      _
    // Predicated region
    $region18: #{tpu_custom_call.1} parent=1 // pred_check
      _
    $region19: #{tpu_custom_call.1} parent=1 // pred_check_branch
      %34 = sbr.rel (0) target = $region21
    $region20: #{tpu_custom_call.1} parent=1 // pred_region
      _
    $region21: #{tpu_custom_call.1} parent=1 // pred_fallthru
      _
    // Predicated region
    $region22: #{tpu_custom_call.1} parent=1 // pred_check
      _
    $region23: #{tpu_custom_call.1} parent=1 // pred_check_branch
      %36 = sbr.rel (0) target = $region25
    $region24: #{tpu_custom_call.1} parent=1 // pred_region
      _
    $region25: #{tpu_custom_call.1} parent=1 // pred_fallthru
      _
    // Predicated region
    $region26: #{tpu_custom_call.1} parent=1 // pred_check
      _
    $region27: #{tpu_custom_call.1} parent=1 // pred_check_branch
      %38 = sbr.rel (0) target = $region29
    $region28: #{tpu_custom_call.1} parent=1 // pred_region
      _
    $region29: #{tpu_custom_call.1} parent=1 // pred_fallthru
      _
    // Predicated region
    $region30: #{tpu_custom_call.1} parent=1 // pred_check
      _
    $region31: #{tpu_custom_call.1} parent=1 // pred_check_branch
      %40 = sbr.rel (0) target = $region33
    $region32: #{tpu_custom_call.1} parent=1 // pred_region
      _
    $region33: #{tpu_custom_call.1} parent=1 // pred_fallthru
      _
    // Predicated region
    $region34: #{tpu_custom_call.1} parent=1 // pred_check
      _
    $region35: #{tpu_custom_call.1} parent=1 // pred_check_branch
      %42 = sbr.rel (0) target = $region37
    $region36: #{tpu_custom_call.1} parent=1 // pred_region
      %43 = dma.done [#allocation4], 128
    $region37: #{tpu_custom_call.1} parent=1 // pred_fallthru
      _
    %v45 = vld [vmem:[#allocation3] sm:$0xf]
    %s46 = scalar_lea.vmem [#allocation3], 4
    %v47 = vld [vmem:[%s46] sm:$0xf]
    %v48 = vld [vmem:[%s1] sm:$0xff]
    %v49 = vld [vmem:[%s1 + $0x8] sm:$0xff]
    %v50 = vld [vmem:[%s1 + $0x10] sm:$0xff]
    %v51 = vld [vmem:[%s1 + $0x18] sm:$0xff]
    %v52 = vld [vmem:[%s1 + $0x20] sm:$0xff]
    %v53 = vld [vmem:[%s1 + $0x28] sm:$0xff]
    %v54 = vld [vmem:[%s1 + $0x30] sm:$0xff]
    %v55 = vld [vmem:[%s1 + $0x38] sm:$0xff]
    %s56 = scalar_lea.vmem %s1, 64
    %v57 = vld [vmem:[%s56] sm:$0xff]
    %v58 = vld [vmem:[%s56 + $0x8] sm:$0xff]
    %v59 = vld [vmem:[%s56 + $0x10] sm:$0xff]
    %v60 = vld [vmem:[%s56 + $0x18] sm:$0xff]
    %v61 = vld [vmem:[%s56 + $0x20] sm:$0xff]
    %v62 = vld [vmem:[%s56 + $0x28] sm:$0xff]
    %v63 = vld [vmem:[%s56 + $0x30] sm:$0xff]
    %v64 = vld [vmem:[%s56 + $0x38] sm:$0xff]
    %v65 = vlaneseq
    %v66 = vand.u32 %v65, 127
    %v67 = vadd.s32 %v66, 128
    %v68 = vand.u32 %v66, 127
    %v69 = vand.u32 %v67, 127
    %v70 = vld [vmem:[%s2] sm:$0xf]
    %v71 = vld [vmem:[%s2 + $0x4] sm:$0xf]
    %v72 = vpack.c.bf16 %v45, %v45
    %v73 = vpack.c.bf16 %v47, %v47
    %v74 = vld [vmem:[%s7] sm:$0xff]
    %v75 = vld [vmem:[%s7 + $0x8] sm:$0xff]
    %77 = vset.pattern.permute.xlu0 0
    %78 = vperm.xlu0 %77, %v74
    %v79 = vpop.permute.xlu0 %78
    %82 = vset.pattern.permute.xlu0 0
    %83 = vperm.xlu0 %82, %v75
    %v84 = vpop.permute.xlu0 %83
    %v88 = vunpack.c.l.b16 %v70
    %v89 = vunpack.c.l.b16 %v71
    %v90 = vpack.c.b16 %v89, %v88
    %vm91 = vcmask 31744
    %v93 = vsel %vm91, %v90, 0
    %vm95 = vcmask 1041408
    %v97 = vsel %vm95, %v72, 0
    %v100 = vsel %vm95, %v73, 0
    %102 = vmatprep.subr.bf16.mxu0 %v100
    %103 = vmatpush1.bf16.msra.mxu0 %v97
    %104 = vmatprep.subr.bf16.mxu0 0
    %105 = vmatpush1.bf16.msra.mxu0 0
    %106 = vmatprep.subr.bf16.mxu0 0
    %107 = vmatpush1.bf16.msra.mxu0 0
    %108 = vmatprep.subr.bf16.mxu0 0
    %109 = vmatpush1.bf16.msra.mxu0 0
    %110 = vmatprep.subr.bf16.mxu0 0
    %111 = vmatpush1.bf16.msra.mxu0 0
    %112 = vmatprep.subr.bf16.mxu0 0
    %113 = vmatpush1.bf16.msra.mxu0 0
    %114 = vmatprep.subr.bf16.mxu0 0
    %115 = vmatpush1.bf16.msra.mxu0 0
    %116 = vmatprep.subr.bf16.mxu0 0
    %117 = vmatpush1.bf16.msra.mxu0 0
    %118 = vmatprep.subr.bf16.mxu0 0
    %119 = vmatpush1.bf16.msra.mxu0 0
    %120 = vmatprep.subr.bf16.mxu0 0
    %121 = vmatpush1.bf16.msra.mxu0 0
    %122 = vmatprep.subr.bf16.mxu0 0
    %123 = vmatpush1.bf16.msra.mxu0 0
    %124 = vmatprep.subr.bf16.mxu0 0
    %125 = vmatpush1.bf16.msra.mxu0 0
    %126 = vmatprep.subr.bf16.mxu0 0
    %127 = vmatpush1.bf16.msra.mxu0 0
    %128 = vmatprep.subr.bf16.mxu0 0
    %129 = vmatpush1.bf16.msra.mxu0 0
    %130 = vmatprep.subr.bf16.mxu0 0
    %131 = vmatpush1.bf16.msra.mxu0 0
    %132 = vmatprep.subr.bf16.mxu0 0
    %133 = vmatpush1.bf16.msra.mxu0 0
    %134 = vmatprep.mubr.bf16.mxu0 0
    %135 = vmatmul.mubr.bf16.gmra.mrb[0].mxu0 %v93
    %v136 = vpop.f32.mrb[0].mxu0
    %v137 = vadd.f32 %v79, %v136
    %v138 = vpop.f32.mrb[0].mxu0
    %v139 = vadd.f32 %v79, %v138
    %v140 = vpop.f32.mrb[0].mxu0
    %v141 = vadd.f32 %v84, %v140
    %v142 = vpop.f32.mrb[0].mxu0
    %v143 = vadd.f32 %v84, %v142
    %144 = vdwg.mxu0
    %v145 = vld [vmem:[%s3] sm:$0xf]
    %v146 = vld [vmem:[%s3 + $0x4] sm:$0xf]
    %v147 = vld [vmem:[%s3 + $0x8] sm:$0xf]
    %v148 = vld [vmem:[%s3 + $0xc] sm:$0xf]
    %v149 = vld [vmem:[%s3 + $0x10] sm:$0xf]
    %v150 = vld [vmem:[%s3 + $0x14] sm:$0xf]
    %v151 = vld [vmem:[%s3 + $0x18] sm:$0xf]
    %v152 = vld [vmem:[%s3 + $0x1c] sm:$0xf]
    %v153 = vpack.c.bf16 %v49, %v48
    %v154 = vpack.c.bf16 %v58, %v57
    %v155 = vpack.c.bf16 %v51, %v50
    %v156 = vpack.c.bf16 %v60, %v59
    %v157 = vpack.c.bf16 %v53, %v52
    %v158 = vpack.c.bf16 %v62, %v61
    %v159 = vpack.c.bf16 %v55, %v54
    %v160 = vpack.c.bf16 %v64, %v63
    %v161 = vld [vmem:[%s7 + $0x10] sm:$0xff]
    %v162 = vld [vmem:[%s7 + $0x18] sm:$0xff]
    %v163 = vld [vmem:[%s7 + $0x20] sm:$0xff]
    %v164 = vld [vmem:[%s7 + $0x28] sm:$0xff]
    %v165 = vld [vmem:[%s7 + $0x30] sm:$0xff]
    %v166 = vld [vmem:[%s7 + $0x38] sm:$0xff]
    %v167 = vld [vmem:[%s7 + $0x40] sm:$0xff]
    %v168 = vld [vmem:[%s7 + $0x48] sm:$0xff]
    %170 = vset.pattern.permute.xlu0 0
    %171 = vperm.xlu0 %170, %v161
    %v172 = vpop.permute.xlu0 %171
    %175 = vset.pattern.permute.xlu0 0
    %176 = vperm.xlu0 %175, %v162
    %v177 = vpop.permute.xlu0 %176
    %180 = vset.pattern.permute.xlu0 0
    %181 = vperm.xlu0 %180, %v163
    %v182 = vpop.permute.xlu0 %181
    %185 = vset.pattern.permute.xlu0 0
    %186 = vperm.xlu0 %185, %v164
    %v187 = vpop.permute.xlu0 %186
    %190 = vset.pattern.permute.xlu0 0
    %191 = vperm.xlu0 %190, %v165
    %v192 = vpop.permute.xlu0 %191
    %195 = vset.pattern.permute.xlu0 0
    %196 = vperm.xlu0 %195, %v166
    %v197 = vpop.permute.xlu0 %196
    %200 = vset.pattern.permute.xlu0 0
    %201 = vperm.xlu0 %200, %v167
    %v202 = vpop.permute.xlu0 %201
    %205 = vset.pattern.permute.xlu0 0
    %206 = vperm.xlu0 %205, %v168
    %v207 = vpop.permute.xlu0 %206
    %v217 = vunpack.c.l.b16 %v145
    %v218 = vunpack.c.l.b16 %v146
    %v219 = vunpack.c.l.b16 %v147
    %v220 = vunpack.c.l.b16 %v148
    %v221 = vunpack.c.l.b16 %v149
    %v222 = vunpack.c.l.b16 %v150
    %v223 = vunpack.c.l.b16 %v151
    %v224 = vunpack.c.l.b16 %v152
    %v225 = vpack.c.b16 %v218, %v217
    %v226 = vpack.c.b16 %v220, %v219
    %v227 = vpack.c.b16 %v222, %v221
    %v228 = vpack.c.b16 %v224, %v223
    %vm229 = vcmask 523264
    %v231 = vsel %vm229, %v225, 0
    %v234 = vsel %vm229, %v226, 0
    %v237 = vsel %vm229, %v227, 0
    %v240 = vsel %vm229, %v228, 0
    %242 = vmatprep.subr.bf16.mxu0 %v154
    %243 = vmatpush1.bf16.msra.mxu0 %v153
    %244 = vmatprep.subr.bf16.mxu0 %v156
    %245 = vmatpush1.bf16.msra.mxu0 %v155
    %246 = vmatprep.subr.bf16.mxu0 %v158
    %247 = vmatpush1.bf16.msra.mxu0 %v157
    %248 = vmatprep.subr.bf16.mxu0 %v160
    %249 = vmatpush1.bf16.msra.mxu0 %v159
    %250 = vmatprep.subr.bf16.mxu0 0
    %251 = vmatpush1.bf16.msra.mxu0 0
    %252 = vmatprep.subr.bf16.mxu0 0
    %253 = vmatpush1.bf16.msra.mxu0 0
    %254 = vmatprep.subr.bf16.mxu0 0
    %255 = vmatpush1.bf16.msra.mxu0 0
    %256 = vmatprep.subr.bf16.mxu0 0
    %257 = vmatpush1.bf16.msra.mxu0 0
    %258 = vmatprep.subr.bf16.mxu0 0
    %259 = vmatpush1.bf16.msra.mxu0 0
    %260 = vmatprep.subr.bf16.mxu0 0
    %261 = vmatpush1.bf16.msra.mxu0 0
    %262 = vmatprep.subr.bf16.mxu0 0
    %263 = vmatpush1.bf16.msra.mxu0 0
    %264 = vmatprep.subr.bf16.mxu0 0
    %265 = vmatpush1.bf16.msra.mxu0 0
    %266 = vmatprep.subr.bf16.mxu0 0
    %267 = vmatpush1.bf16.msra.mxu0 0
    %268 = vmatprep.subr.bf16.mxu0 0
    %269 = vmatpush1.bf16.msra.mxu0 0
    %270 = vmatprep.subr.bf16.mxu0 0
    %271 = vmatpush1.bf16.msra.mxu0 0
    %272 = vmatprep.subr.bf16.mxu0 0
    %273 = vmatpush1.bf16.msra.mxu0 0
    %274 = vmatprep.mubr.bf16.mxu0 0
    %275 = vmatmul.mubr.bf16.gmra.mrb[0].mxu0 %v231
    %v276 = vpop.f32.mrb[0].mxu0
    %v277 = vadd.f32 %v172, %v276
    %v278 = vpop.f32.mrb[0].mxu0
    %v279 = vadd.f32 %v172, %v278
    %v280 = vpop.f32.mrb[0].mxu0
    %v281 = vadd.f32 %v177, %v280
    %v282 = vpop.f32.mrb[0].mxu0
    %v283 = vadd.f32 %v177, %v282
    %284 = vmatprep.mubr.bf16.mxu0 0
    %285 = vmatmul.mubr.bf16.gmra.mrb[0].mxu0 %v234
    %v286 = vpop.f32.mrb[0].mxu0
    %v287 = vadd.f32 %v182, %v286
    %v288 = vpop.f32.mrb[0].mxu0
    %v289 = vadd.f32 %v182, %v288
    %v290 = vpop.f32.mrb[0].mxu0
    %v291 = vadd.f32 %v187, %v290
    %v292 = vpop.f32.mrb[0].mxu0
    %v293 = vadd.f32 %v187, %v292
    %294 = vmatprep.mubr.bf16.mxu0 0
    %295 = vmatmul.mubr.bf16.gmra.mrb[0].mxu0 %v237
    %v296 = vpop.f32.mrb[0].mxu0
    %v297 = vadd.f32 %v192, %v296
    %v298 = vpop.f32.mrb[0].mxu0
    %v299 = vadd.f32 %v192, %v298
    %v300 = vpop.f32.mrb[0].mxu0
    %v301 = vadd.f32 %v197, %v300
    %v302 = vpop.f32.mrb[0].mxu0
    %v303 = vadd.f32 %v197, %v302
    %304 = vmatprep.mubr.bf16.mxu0 0
    %305 = vmatmul.mubr.bf16.gmra.mrb[0].mxu0 %v240
    %v306 = vpop.f32.mrb[0].mxu0
    %v307 = vadd.f32 %v202, %v306
    %v308 = vpop.f32.mrb[0].mxu0
    %v309 = vadd.f32 %v202, %v308
    %v310 = vpop.f32.mrb[0].mxu0
    %v311 = vadd.f32 %v207, %v310
    %v312 = vpop.f32.mrb[0].mxu0
    %v313 = vadd.f32 %v207, %v312
    %314 = vdwg.mxu0
    %315 = vst [vmem:[#allocation2] sm:$0xff] 0.0
    %316 = vst [vmem:[#allocation2 + $0x8] sm:$0xff] 0.0
    %317 = vst.msk [vmem:[#allocation2 + $0x10] sm:$0xff] %vm91, 0.0
    %318 = vst [vmem:[#allocation2 + $0x18] sm:$0xff] 0.0
    %319 = vst [vmem:[#allocation2 + $0x20] sm:$0xff] 0.0
    %320 = vst.msk [vmem:[#allocation2 + $0x28] sm:$0xff] %vm91, 0.0
    %325 = vrot.lane.b32.xlu0 %v137, 2
    %v326 = vpop.permute.xlu0 %325
    %327 = vrot.lane.b32.xlu0 %v139, 2
    %v328 = vpop.permute.xlu0 %327
    %329 = vrot.lane.b32.xlu0 %v141, 2
    %v330 = vpop.permute.xlu0 %329
    %331 = vrot.lane.b32.xlu0 %v143, 2
    %v332 = vpop.permute.xlu0 %331
    %vm333 = vcmask 15360
    %v334 = vsel %vm333, %v326, %v328
    %v335 = vsel %vm333, %v330, %v332
    %vm342 = vcmask 1047568
    %343 = vst.msk [vmem:[#allocation2] sm:$0xff] %vm342, %v326
    %344 = vst [vmem:[#allocation2 + $0x8] sm:$0xff] %v334
    %345 = vst.msk [vmem:[#allocation2 + $0x10] sm:$0xff] %vm333, %v328
    %346 = vst.msk [vmem:[#allocation2 + $0x18] sm:$0xff] %vm342, %v330
    %347 = vst [vmem:[#allocation2 + $0x20] sm:$0xff] %v335
    %348 = vst.msk [vmem:[#allocation2 + $0x28] sm:$0xff] %vm333, %v332
    %v349 = vld [vmem:[#allocation2] sm:$0xff]
    %v350 = vld [vmem:[#allocation2 + $0x8] sm:$0xff]
    %v351 = vld [vmem:[#allocation2 + $0x10] sm:$0xff]
    %v352 = vld [vmem:[#allocation2 + $0x18] sm:$0xff]
    %v353 = vld [vmem:[#allocation2 + $0x20] sm:$0xff]
    %v354 = vld [vmem:[#allocation2 + $0x28] sm:$0xff]
    %vm355 = vcmp.ge.s32.totalorder %v68, 1
    %vm356 = vcmp.ge.s32.totalorder %v69, 1
    %363 = vrot.lane.b32.xlu0 %v349, 127
    %v364 = vpop.permute.xlu0 %363
    %365 = vrot.lane.b32.xlu0 %v350, 127
    %v366 = vpop.permute.xlu0 %365
    %367 = vrot.lane.b32.xlu0 %v351, 127
    %v368 = vpop.permute.xlu0 %367
    %369 = vrot.lane.b32.xlu0 %v352, 127
    %v370 = vpop.permute.xlu0 %369
    %371 = vrot.lane.b32.xlu0 %v353, 127
    %v372 = vpop.permute.xlu0 %371
    %373 = vrot.lane.b32.xlu0 %v354, 127
    %v374 = vpop.permute.xlu0 %373
    %vm375 = vcmask 1039360
    %v376 = vsel %vm375, %v364, %v366
    %v377 = vsel %vm375, %v366, %v368
    %v378 = vsel %vm375, %v370, %v372
    %v379 = vsel %vm375, %v372, %v374
    %v384 = vsel %vm355, %v376, 0.0
    %v385 = vsel %vm356, %v377, 0.0
    %v386 = vsel %vm355, %v378, 0.0
    %v387 = vsel %vm356, %v379, 0.0
    %vm388 = vcmp.lt.s32.totalorder %v68, 127
    %vm389 = vcmp.lt.s32.totalorder %v69, 127
    %390 = vrot.lane.b32.xlu0 %v349, 125
    %v391 = vpop.permute.xlu0 %390
    %392 = vrot.lane.b32.xlu0 %v350, 125
    %v393 = vpop.permute.xlu0 %392
    %394 = vrot.lane.b32.xlu0 %v351, 125
    %v395 = vpop.permute.xlu0 %394
    %396 = vrot.lane.b32.xlu0 %v352, 125
    %v397 = vpop.permute.xlu0 %396
    %398 = vrot.lane.b32.xlu0 %v353, 125
    %v399 = vpop.permute.xlu0 %398
    %400 = vrot.lane.b32.xlu0 %v354, 125
    %v401 = vpop.permute.xlu0 %400
    %vm402 = vcmask 1022976
    %v403 = vsel %vm402, %v391, %v393
    %v404 = vsel %vm402, %v393, %v395
    %v405 = vsel %vm402, %v397, %v399
    %v406 = vsel %vm402, %v399, %v401
    %v411 = vsel %vm388, %v403, 0.0
    %v412 = vsel %vm389, %v404, 0.0
    %v413 = vsel %vm388, %v405, 0.0
    %v414 = vsel %vm389, %v406, 0.0
    %v415 = vld [vmem:[%s4] sm:$0xf]
    %v416 = vld [vmem:[%s4 + $0x4] sm:$0xf]
    %v417 = vld [vmem:[%s4 + $0x8] sm:$0xf]
    %v418 = vld [vmem:[%s4 + $0xc] sm:$0xf]
    %v419 = vpack.c.bf16 %v386, %v384
    %v420 = vpack.c.bf16 %v387, %v385
    %v421 = vpack.c.bf16 %v141, %v137
    %v422 = vpack.c.bf16 %v143, %v139
    %v423 = vpack.c.bf16 %v413, %v411
    %v424 = vpack.c.bf16 %v414, %v412
    %v429 = vunpack.c.l.b16 %v415
    %v430 = vunpack.c.l.b16 %v416
    %v431 = vunpack.c.l.b16 %v417
    %v432 = vunpack.c.l.b16 %v418
    %v433 = vpack.c.b16 %v430, %v429
    %v434 = vpack.c.b16 %v432, %v431
    %vm435 = vcmask 392192
    %v437 = vsel %vm435, %v433, 0
    %v440 = vsel %vm435, %v434, 0
    %442 = vmatprep.subr.bf16.mxu0 %v420
    %443 = vmatpush1.bf16.msra.mxu0 %v419
    %444 = vmatprep.subr.bf16.mxu0 %v422
    %445 = vmatpush1.bf16.msra.mxu0 %v421
    %446 = vmatprep.subr.bf16.mxu0 %v424
    %447 = vmatpush1.bf16.msra.mxu0 %v423
    %448 = vmatprep.subr.bf16.mxu0 0
    %449 = vmatpush1.bf16.msra.mxu0 0
    %450 = vmatprep.subr.bf16.mxu0 0
    %451 = vmatpush1.bf16.msra.mxu0 0
    %452 = vmatprep.subr.bf16.mxu0 0
    %453 = vmatpush1.bf16.msra.mxu0 0
    %454 = vmatprep.subr.bf16.mxu0 0
    %455 = vmatpush1.bf16.msra.mxu0 0
    %456 = vmatprep.subr.bf16.mxu0 0
    %457 = vmatpush1.bf16.msra.mxu0 0
    %458 = vmatprep.subr.bf16.mxu0 0
    %459 = vmatpush1.bf16.msra.mxu0 0
    %460 = vmatprep.subr.bf16.mxu0 0
    %461 = vmatpush1.bf16.msra.mxu0 0
    %462 = vmatprep.subr.bf16.mxu0 0
    %463 = vmatpush1.bf16.msra.mxu0 0
    %464 = vmatprep.subr.bf16.mxu0 0
    %465 = vmatpush1.bf16.msra.mxu0 0
    %466 = vmatprep.subr.bf16.mxu0 0
    %467 = vmatpush1.bf16.msra.mxu0 0
    %468 = vmatprep.subr.bf16.mxu0 0
    %469 = vmatpush1.bf16.msra.mxu0 0
    %470 = vmatprep.subr.bf16.mxu0 0
    %471 = vmatpush1.bf16.msra.mxu0 0
    %472 = vmatprep.subr.bf16.mxu0 0
    %473 = vmatpush1.bf16.msra.mxu0 0
    %474 = vmatprep.mubr.bf16.mxu0 0
    %475 = vmatmul.mubr.bf16.gmra.mrb[0].mxu0 %v437
    %v476 = vpop.f32.mrb[0].mxu0
    %v477 = vadd.f32 %v277, %v476
    %v478 = vpop.f32.mrb[0].mxu0
    %v479 = vadd.f32 %v279, %v478
    %v480 = vpop.f32.mrb[0].mxu0
    %v481 = vadd.f32 %v281, %v480
    %v482 = vpop.f32.mrb[0].mxu0
    %v483 = vadd.f32 %v283, %v482
    %484 = vmatprep.mubr.bf16.mxu0 0
    %485 = vmatmul.mubr.bf16.gmra.mrb[0].mxu0 %v440
    %v486 = vpop.f32.mrb[0].mxu0
    %v487 = vadd.f32 %v287, %v486
    %v488 = vpop.f32.mrb[0].mxu0
    %v489 = vadd.f32 %v289, %v488
    %v490 = vpop.f32.mrb[0].mxu0
    %v491 = vadd.f32 %v291, %v490
    %v492 = vpop.f32.mrb[0].mxu0
    %v493 = vadd.f32 %v293, %v492
    %494 = vdwg.mxu0
    %v495 = vtanh.pop %v477
    %v496 = vtanh.pop %v479
    %v497 = vtanh.pop %v481
    %v498 = vtanh.pop %v483
    %v499 = vxor.u32 %v487, 2147483648
    %v500 = vxor.u32 %v489, 2147483648
    %v501 = vxor.u32 %v491, 2147483648
    %v502 = vxor.u32 %v493, 2147483648
    %v503 = vmul.f32 %v499, 1.442695
    %v504 = vpow.pop %v503
    %v505 = vmul.f32 %v500, 1.442695
    %v506 = vpow.pop %v505
    %v507 = vmul.f32 %v501, 1.442695
    %v508 = vpow.pop %v507
    %v509 = vmul.f32 %v502, 1.442695
    %v510 = vpow.pop %v509
    %v511 = vadd.f32 %v504, 1.0
    %v512 = vadd.f32 %v506, 1.0
    %v513 = vadd.f32 %v508, 1.0
    %v514 = vadd.f32 %v510, 1.0
    %v515 = vrcp.pop %v511
    %v516 = vmul.f32 1.0, %v515
    %v517 = vrcp.pop %v512
    %v518 = vmul.f32 1.0, %v517
    %v519 = vrcp.pop %v513
    %v520 = vmul.f32 1.0, %v519
    %v521 = vrcp.pop %v514
    %v522 = vmul.f32 1.0, %v521
    %v523 = vmul.f32 %v495, %v516
    %v524 = vmul.f32 %v496, %v518
    %v525 = vmul.f32 %v497, %v520
    %v526 = vmul.f32 %v498, %v522
    %v527 = vld [vmem:[%s5] sm:$0xf]
    %v528 = vld [vmem:[%s5 + $0x4] sm:$0xf]
    %v529 = vld [vmem:[%s5 + $0x8] sm:$0xf]
    %v530 = vld [vmem:[%s5 + $0xc] sm:$0xf]
    %v531 = vpack.c.bf16 %v525, %v523
    %v532 = vpack.c.bf16 %v526, %v524
    %v533 = vld [vmem:[%s7 + $0x50] sm:$0xff]
    %v534 = vld [vmem:[%s7 + $0x58] sm:$0xff]
    %v535 = vld [vmem:[%s7 + $0x60] sm:$0xff]
    %v536 = vld [vmem:[%s7 + $0x68] sm:$0xff]
    %538 = vset.pattern.permute.xlu0 0
    %539 = vperm.xlu0 %538, %v533
    %v540 = vpop.permute.xlu0 %539
    %543 = vset.pattern.permute.xlu0 0
    %544 = vperm.xlu0 %543, %v534
    %v545 = vpop.permute.xlu0 %544
    %548 = vset.pattern.permute.xlu0 0
    %549 = vperm.xlu0 %548, %v535
    %v550 = vpop.permute.xlu0 %549
    %553 = vset.pattern.permute.xlu0 0
    %554 = vperm.xlu0 %553, %v536
    %v555 = vpop.permute.xlu0 %554
    %v561 = vunpack.c.l.b16 %v527
    %v562 = vunpack.c.l.b16 %v528
    %v563 = vunpack.c.l.b16 %v529
    %v564 = vunpack.c.l.b16 %v530
    %v565 = vpack.c.b16 %v562, %v561
    %v566 = vpack.c.b16 %v564, %v563
    %vm567 = vcmask 130048
    %v569 = vsel %vm567, %v565, 0
    %v572 = vsel %vm567, %v566, 0
    %574 = vmatprep.subr.bf16.mxu0 %v532
    %575 = vmatpush1.bf16.msra.mxu0 %v531
    %576 = vmatprep.subr.bf16.mxu0 0
    %577 = vmatpush1.bf16.msra.mxu0 0
    %578 = vmatprep.subr.bf16.mxu0 0
    %579 = vmatpush1.bf16.msra.mxu0 0
    %580 = vmatprep.subr.bf16.mxu0 0
    %581 = vmatpush1.bf16.msra.mxu0 0
    %582 = vmatprep.subr.bf16.mxu0 0
    %583 = vmatpush1.bf16.msra.mxu0 0
    %584 = vmatprep.subr.bf16.mxu0 0
    %585 = vmatpush1.bf16.msra.mxu0 0
    %586 = vmatprep.subr.bf16.mxu0 0
    %587 = vmatpush1.bf16.msra.mxu0 0
    %588 = vmatprep.subr.bf16.mxu0 0
    %589 = vmatpush1.bf16.msra.mxu0 0
    %590 = vmatprep.subr.bf16.mxu0 0
    %591 = vmatpush1.bf16.msra.mxu0 0
    %592 = vmatprep.subr.bf16.mxu0 0
    %593 = vmatpush1.bf16.msra.mxu0 0
    %594 = vmatprep.subr.bf16.mxu0 0
    %595 = vmatpush1.bf16.msra.mxu0 0
    %596 = vmatprep.subr.bf16.mxu0 0
    %597 = vmatpush1.bf16.msra.mxu0 0
    %598 = vmatprep.subr.bf16.mxu0 0
    %599 = vmatpush1.bf16.msra.mxu0 0
    %600 = vmatprep.subr.bf16.mxu0 0
    %601 = vmatpush1.bf16.msra.mxu0 0
    %602 = vmatprep.subr.bf16.mxu0 0
    %603 = vmatpush1.bf16.msra.mxu0 0
    %604 = vmatprep.subr.bf16.mxu0 0
    %605 = vmatpush1.bf16.msra.mxu0 0
    %606 = vmatprep.mubr.bf16.mxu0 0
    %607 = vmatmul.mubr.bf16.gmra.mrb[0].mxu0 %v569
    %v608 = vpop.f32.mrb[0].mxu0
    %v609 = vadd.f32 %v540, %v608
    %v610 = vpop.f32.mrb[0].mxu0
    %v611 = vadd.f32 %v540, %v610
    %v612 = vpop.f32.mrb[0].mxu0
    %v613 = vadd.f32 %v545, %v612
    %v614 = vpop.f32.mrb[0].mxu0
    %v615 = vadd.f32 %v545, %v614
    %616 = vmatprep.mubr.bf16.mxu0 0
    %617 = vmatmul.mubr.bf16.gmra.mrb[0].mxu0 %v572
    %v618 = vpop.f32.mrb[0].mxu0
    %v619 = vadd.f32 %v550, %v618
    %v620 = vpop.f32.mrb[0].mxu0
    %v621 = vadd.f32 %v550, %v620
    %v622 = vpop.f32.mrb[0].mxu0
    %v623 = vadd.f32 %v555, %v622
    %v624 = vpop.f32.mrb[0].mxu0
    %v625 = vadd.f32 %v555, %v624
    %626 = vdwg.mxu0
    %v627 = vadd.f32 %v137, %v609
    %v628 = vadd.f32 %v139, %v611
    %v629 = vadd.f32 %v141, %v613
    %v630 = vadd.f32 %v143, %v615
    %635 = vrot.lane.b32.xlu0 %v627, 2
    %v636 = vpop.permute.xlu0 %635
    %637 = vrot.lane.b32.xlu0 %v628, 2
    %v638 = vpop.permute.xlu0 %637
    %639 = vrot.lane.b32.xlu0 %v629, 2
    %v640 = vpop.permute.xlu0 %639
    %641 = vrot.lane.b32.xlu0 %v630, 2
    %v642 = vpop.permute.xlu0 %641
    %v643 = vsel %vm333, %v636, %v638
    %v644 = vsel %vm333, %v640, %v642
    %651 = vst.msk [vmem:[#allocation2] sm:$0xff] %vm342, %v636
    %652 = vst [vmem:[#allocation2 + $0x8] sm:$0xff] %v643
    %653 = vst.msk [vmem:[#allocation2 + $0x10] sm:$0xff] %vm333, %v638
    %654 = vst.msk [vmem:[#allocation2 + $0x18] sm:$0xff] %vm342, %v640
    %655 = vst [vmem:[#allocation2 + $0x20] sm:$0xff] %v644
    %656 = vst.msk [vmem:[#allocation2 + $0x28] sm:$0xff] %vm333, %v642
    %v657 = vld [vmem:[#allocation2] sm:$0xff]
    %v658 = vld [vmem:[#allocation2 + $0x8] sm:$0xff]
    %v659 = vld [vmem:[#allocation2 + $0x18] sm:$0xff]
    %v660 = vld [vmem:[#allocation2 + $0x20] sm:$0xff]
    %vm661 = vcmp.ge.s32.totalorder %v68, 2
    %vm662 = vcmp.ge.s32.totalorder %v69, 2
    %v663 = vsel %vm661, %v657, 0.0
    %v664 = vsel %vm662, %v658, 0.0
    %v665 = vsel %vm661, %v659, 0.0
    %v666 = vsel %vm662, %v660, 0.0
    %v667 = vld [vmem:[#allocation2 + $0x10] sm:$0xff]
    %v668 = vld [vmem:[#allocation2 + $0x28] sm:$0xff]
    %vm669 = vcmp.lt.s32.totalorder %v68, 126
    %vm670 = vcmp.lt.s32.totalorder %v69, 126
    %677 = vrot.lane.b32.xlu0 %v657, 124
    %v678 = vpop.permute.xlu0 %677
    %679 = vrot.lane.b32.xlu0 %v658, 124
    %v680 = vpop.permute.xlu0 %679
    %681 = vrot.lane.b32.xlu0 %v667, 124
    %v682 = vpop.permute.xlu0 %681
    %683 = vrot.lane.b32.xlu0 %v659, 124
    %v684 = vpop.permute.xlu0 %683
    %685 = vrot.lane.b32.xlu0 %v660, 124
    %v686 = vpop.permute.xlu0 %685
    %687 = vrot.lane.b32.xlu0 %v668, 124
    %v688 = vpop.permute.xlu0 %687
    %vm689 = vcmask 1014784
    %v690 = vsel %vm689, %v678, %v680
    %v691 = vsel %vm689, %v680, %v682
    %v692 = vsel %vm689, %v684, %v686
    %v693 = vsel %vm689, %v686, %v688
    %v698 = vsel %vm669, %v690, 0.0
    %v699 = vsel %vm670, %v691, 0.0
    %v700 = vsel %vm669, %v692, 0.0
    %v701 = vsel %vm670, %v693, 0.0
    %s702 = scalar_lea.vmem %s4, 16
    %v703 = vld [vmem:[%s702] sm:$0xf]
    %v704 = vld [vmem:[%s702 + $0x4] sm:$0xf]
    %v705 = vld [vmem:[%s702 + $0x8] sm:$0xf]
    %v706 = vld [vmem:[%s702 + $0xc] sm:$0xf]
    %v707 = vpack.c.bf16 %v665, %v663
    %v708 = vpack.c.bf16 %v666, %v664
    %v709 = vpack.c.bf16 %v629, %v627
    %v710 = vpack.c.bf16 %v630, %v628
    %v711 = vpack.c.bf16 %v700, %v698
    %v712 = vpack.c.bf16 %v701, %v699
    %v717 = vunpack.c.l.b16 %v703
    %v718 = vunpack.c.l.b16 %v704
    %v719 = vunpack.c.l.b16 %v705
    %v720 = vunpack.c.l.b16 %v706
    %v721 = vpack.c.b16 %v718, %v717
    %v722 = vpack.c.b16 %v720, %v719
    %v724 = vsel %vm435, %v721, 0
    %v727 = vsel %vm435, %v722, 0
    %729 = vmatprep.subr.bf16.mxu0 %v708
    %730 = vmatpush1.bf16.msra.mxu0 %v707
    %731 = vmatprep.subr.bf16.mxu0 %v710
    %732 = vmatpush1.bf16.msra.mxu0 %v709
    %733 = vmatprep.subr.bf16.mxu0 %v712
    %734 = vmatpush1.bf16.msra.mxu0 %v711
    %735 = vmatprep.subr.bf16.mxu0 0
    %736 = vmatpush1.bf16.msra.mxu0 0
    %737 = vmatprep.subr.bf16.mxu0 0
    %738 = vmatpush1.bf16.msra.mxu0 0
    %739 = vmatprep.subr.bf16.mxu0 0
    %740 = vmatpush1.bf16.msra.mxu0 0
    %741 = vmatprep.subr.bf16.mxu0 0
    %742 = vmatpush1.bf16.msra.mxu0 0
    %743 = vmatprep.subr.bf16.mxu0 0
    %744 = vmatpush1.bf16.msra.mxu0 0
    %745 = vmatprep.subr.bf16.mxu0 0
    %746 = vmatpush1.bf16.msra.mxu0 0
    %747 = vmatprep.subr.bf16.mxu0 0
    %748 = vmatpush1.bf16.msra.mxu0 0
    %749 = vmatprep.subr.bf16.mxu0 0
    %750 = vmatpush1.bf16.msra.mxu0 0
    %751 = vmatprep.subr.bf16.mxu0 0
    %752 = vmatpush1.bf16.msra.mxu0 0
    %753 = vmatprep.subr.bf16.mxu0 0
    %754 = vmatpush1.bf16.msra.mxu0 0
    %755 = vmatprep.subr.bf16.mxu0 0
    %756 = vmatpush1.bf16.msra.mxu0 0
    %757 = vmatprep.subr.bf16.mxu0 0
    %758 = vmatpush1.bf16.msra.mxu0 0
    %759 = vmatprep.subr.bf16.mxu0 0
    %760 = vmatpush1.bf16.msra.mxu0 0
    %761 = vmatprep.mubr.bf16.mxu0 0
    %762 = vmatmul.mubr.bf16.gmra.mrb[0].mxu0 %v724
    %v763 = vpop.f32.mrb[0].mxu0
    %v764 = vadd.f32 %v297, %v763
    %v765 = vpop.f32.mrb[0].mxu0
    %v766 = vadd.f32 %v299, %v765
    %v767 = vpop.f32.mrb[0].mxu0
    %v768 = vadd.f32 %v301, %v767
    %v769 = vpop.f32.mrb[0].mxu0
    %v770 = vadd.f32 %v303, %v769
    %771 = vmatprep.mubr.bf16.mxu0 0
    %772 = vmatmul.mubr.bf16.gmra.mrb[0].mxu0 %v727
    %v773 = vpop.f32.mrb[0].mxu0
    %v774 = vadd.f32 %v307, %v773
    %v775 = vpop.f32.mrb[0].mxu0
    %v776 = vadd.f32 %v309, %v775
    %v777 = vpop.f32.mrb[0].mxu0
    %v778 = vadd.f32 %v311, %v777
    %v779 = vpop.f32.mrb[0].mxu0
    %v780 = vadd.f32 %v313, %v779
    %781 = vdwg.mxu0
    %v782 = vtanh.pop %v764
    %v783 = vtanh.pop %v766
    %v784 = vtanh.pop %v768
    %v785 = vtanh.pop %v770
    %v786 = vxor.u32 %v774, 2147483648
    %v787 = vxor.u32 %v776, 2147483648
    %v788 = vxor.u32 %v778, 2147483648
    %v789 = vxor.u32 %v780, 2147483648
    %v790 = vmul.f32 %v786, 1.442695
    %v791 = vpow.pop %v790
    %v792 = vmul.f32 %v787, 1.442695
    %v793 = vpow.pop %v792
    %v794 = vmul.f32 %v788, 1.442695
    %v795 = vpow.pop %v794
    %v796 = vmul.f32 %v789, 1.442695
    %v797 = vpow.pop %v796
    %v798 = vadd.f32 %v791, 1.0
    %v799 = vadd.f32 %v793, 1.0
    %v800 = vadd.f32 %v795, 1.0
    %v801 = vadd.f32 %v797, 1.0
    %v802 = vrcp.pop %v798
    %v803 = vmul.f32 1.0, %v802
    %v804 = vrcp.pop %v799
    %v805 = vmul.f32 1.0, %v804
    %v806 = vrcp.pop %v800
    %v807 = vmul.f32 1.0, %v806
    %v808 = vrcp.pop %v801
    %v809 = vmul.f32 1.0, %v808
    %v810 = vmul.f32 %v782, %v803
    %v811 = vmul.f32 %v783, %v805
    %v812 = vmul.f32 %v784, %v807
    %v813 = vmul.f32 %v785, %v809
    %s814 = scalar_lea.vmem %s5, 16
    %v815 = vld [vmem:[%s814] sm:$0xf]
    %v816 = vld [vmem:[%s814 + $0x4] sm:$0xf]
    %v817 = vpack.c.bf16 %v812, %v810
    %v818 = vpack.c.bf16 %v813, %v811
    %v819 = vld [vmem:[%s7 + $0x70] sm:$0xff]
    %v820 = vld [vmem:[%s7 + $0x78] sm:$0xff]
    %822 = vset.pattern.permute.xlu0 0
    %823 = vperm.xlu0 %822, %v819
    %v824 = vpop.permute.xlu0 %823
    %827 = vset.pattern.permute.xlu0 0
    %828 = vperm.xlu0 %827, %v820
    %v829 = vpop.permute.xlu0 %828
    %v833 = vunpack.c.l.b16 %v815
    %v834 = vunpack.c.l.b16 %v816
    %v835 = vpack.c.b16 %v834, %v833
    %v837 = vsel %vm567, %v835, 0
    %839 = vmatprep.subr.bf16.mxu0 %v818
    %840 = vmatpush1.bf16.msra.mxu0 %v817
    %841 = vmatprep.subr.bf16.mxu0 0
    %842 = vmatpush1.bf16.msra.mxu0 0
    %843 = vmatprep.subr.bf16.mxu0 0
    %844 = vmatpush1.bf16.msra.mxu0 0
    %845 = vmatprep.subr.bf16.mxu0 0
    %846 = vmatpush1.bf16.msra.mxu0 0
    %847 = vmatprep.subr.bf16.mxu0 0
    %848 = vmatpush1.bf16.msra.mxu0 0
    %849 = vmatprep.subr.bf16.mxu0 0
    %850 = vmatpush1.bf16.msra.mxu0 0
    %851 = vmatprep.subr.bf16.mxu0 0
    %852 = vmatpush1.bf16.msra.mxu0 0
    %853 = vmatprep.subr.bf16.mxu0 0
    %854 = vmatpush1.bf16.msra.mxu0 0
    %855 = vmatprep.subr.bf16.mxu0 0
    %856 = vmatpush1.bf16.msra.mxu0 0
    %857 = vmatprep.subr.bf16.mxu0 0
    %858 = vmatpush1.bf16.msra.mxu0 0
    %859 = vmatprep.subr.bf16.mxu0 0
    %860 = vmatpush1.bf16.msra.mxu0 0
    %861 = vmatprep.subr.bf16.mxu0 0
    %862 = vmatpush1.bf16.msra.mxu0 0
    %863 = vmatprep.subr.bf16.mxu0 0
    %864 = vmatpush1.bf16.msra.mxu0 0
    %865 = vmatprep.subr.bf16.mxu0 0
    %866 = vmatpush1.bf16.msra.mxu0 0
    %867 = vmatprep.subr.bf16.mxu0 0
    %868 = vmatpush1.bf16.msra.mxu0 0
    %869 = vmatprep.subr.bf16.mxu0 0
    %870 = vmatpush1.bf16.msra.mxu0 0
    %871 = vmatprep.mubr.bf16.mxu0 0
    %872 = vmatmul.mubr.bf16.gmra.mrb[0].mxu0 %v837
    %v873 = vpop.f32.mrb[0].mxu0
    %v874 = vadd.f32 %v824, %v873
    %v875 = vpop.f32.mrb[0].mxu0
    %v876 = vadd.f32 %v824, %v875
    %v877 = vpop.f32.mrb[0].mxu0
    %v878 = vadd.f32 %v829, %v877
    %v879 = vpop.f32.mrb[0].mxu0
    %v880 = vadd.f32 %v829, %v879
    %881 = vdwg.mxu0
    %v882 = vadd.f32 %v619, %v874
    %v883 = vadd.f32 %v621, %v876
    %v884 = vadd.f32 %v623, %v878
    %v885 = vadd.f32 %v625, %v880
    %v886 = vld [vmem:[%s6] sm:$0xf]
    %v887 = vpack.c.bf16 %v884, %v882
    %v888 = vpack.c.bf16 %v885, %v883
    %v889 = vld [vmem:[%s7 + $0x80] sm:$0xff]
    %891 = vset.pattern.permute.xlu0 0
    %892 = vperm.xlu0 %891, %v889
    %v893 = vpop.permute.xlu0 %892
    %v896 = vsel %vm567, %v886, 0
    %898 = vmatprep.subr.bf16.mxu0 %v888
    %899 = vmatpush1.bf16.msra.mxu0 %v887
    %900 = vmatprep.subr.bf16.mxu0 0
    %901 = vmatpush1.bf16.msra.mxu0 0
    %902 = vmatprep.subr.bf16.mxu0 0
    %903 = vmatpush1.bf16.msra.mxu0 0
    %904 = vmatprep.subr.bf16.mxu0 0
    %905 = vmatpush1.bf16.msra.mxu0 0
    %906 = vmatprep.subr.bf16.mxu0 0
    %907 = vmatpush1.bf16.msra.mxu0 0
    %908 = vmatprep.subr.bf16.mxu0 0
    %909 = vmatpush1.bf16.msra.mxu0 0
    %910 = vmatprep.subr.bf16.mxu0 0
    %911 = vmatpush1.bf16.msra.mxu0 0
    %912 = vmatprep.subr.bf16.mxu0 0
    %913 = vmatpush1.bf16.msra.mxu0 0
    %914 = vmatprep.subr.bf16.mxu0 0
    %915 = vmatpush1.bf16.msra.mxu0 0
    %916 = vmatprep.subr.bf16.mxu0 0
    %917 = vmatpush1.bf16.msra.mxu0 0
    %918 = vmatprep.subr.bf16.mxu0 0
    %919 = vmatpush1.bf16.msra.mxu0 0
    %920 = vmatprep.subr.bf16.mxu0 0
    %921 = vmatpush1.bf16.msra.mxu0 0
    %922 = vmatprep.subr.bf16.mxu0 0
    %923 = vmatpush1.bf16.msra.mxu0 0
    %924 = vmatprep.subr.bf16.mxu0 0
    %925 = vmatpush1.bf16.msra.mxu0 0
    %926 = vmatprep.subr.bf16.mxu0 0
    %927 = vmatpush1.bf16.msra.mxu0 0
    %928 = vmatprep.subr.bf16.mxu0 0
    %929 = vmatpush1.bf16.msra.mxu0 0
    %930 = vmatprep.mubr.bf16.mxu0 0
    %931 = vmatmul.mubr.bf16.gmra.mrb[0].mxu0 %v896
    %v932 = vpop.f32.mrb[0].mxu0
    %v933 = vadd.f32 %v893, %v932
    %v934 = vpop.f32.mrb[0].mxu0
    %v935 = vadd.f32 %v893, %v934
    %v936 = vpop.f32.mrb[0].mxu0
    %v937 = vpop.f32.mrb[0].mxu0
    %938 = vdwg.mxu0
    %939 = vst [vmem:[#allocation6] sm:$0xff] %v933
    %s940 = scalar_lea.vmem [#allocation6], 8
    %941 = vst [vmem:[%s940] sm:$0xff] %v935
    // Predicated region
    $region38: #{tpu_custom_call.1} parent=1 // pred_check
      _
    $region39: #{tpu_custom_call.1} parent=1 // pred_check_branch
      %943 = sbr.rel (0) target = $region41
    $region40: #{tpu_custom_call.1} parent=1 // pred_region
      %s945 = ssub.s32 256, 256
      %946 = vsyncadd [#allocation5], %s945
      %s947 = sshll.u32 [#allocation6], 4
      %s948 = int_to_ptr.vmem [resolvable:$true] %s947
      %953 = dma.vmem_to_hbm [thread:$0]  %s948, 256, %s8, [#allocation5], 128, 128, 8
    $region41: #{tpu_custom_call.1} parent=1 // pred_fallthru
      _
    // Predicated region
    $region42: #{tpu_custom_call.1} parent=1 // pred_check
      _
    $region43: #{tpu_custom_call.1} parent=1 // pred_check_branch
      %955 = sbr.rel (0) target = $region45
    $region44: #{tpu_custom_call.1} parent=1 // pred_region
      %956 = dma.done [#allocation5], 256
    $region45: #{tpu_custom_call.1} parent=1 // pred_fallthru
      _
    %957 = vsyncpa [#allocation4], 1
    %958 = vsyncpa [#allocation5], 1

</llo_original>
